<compile_context>
chip_gen: v6e
topology: v6e:2x2x1
jax: 0.10.0
libtpu: 0.0.40
codegen_flags: <defaults>
</compile_context>

<pallas_src>
import jax
import jax.numpy as jnp
from jax.experimental import pallas as pl
from jax.experimental.pallas import tpu as pltpu


def _make_kernel(lane_dense: bool):
    def kernel(x_ref, w1_ref, b1_ref, w2_ref, b2_ref, w3_ref, b3_ref, o_ref):
        # Cast the streamed f32 tile to bf16 on the VPU, hidden under the DMA
        # of the next tile (no separate host-side XLA pass over x).
        x = x_ref[...].astype(jnp.bfloat16)                       # (TB, D)
        # Layer 1: (TB, D)bf16 @ (D, 128)bf16 -> f32 acc, + bias, ReLU.
        h1 = jnp.dot(x, w1_ref[...], preferred_element_type=jnp.float32)
        h1 = jnp.maximum(h1 + b1_ref[...], 0.0)                   # (TB, 128)
        # Layer 2: (TB, 128)bf16 @ (128, 64)bf16 -> f32 acc, + bias, ReLU.
        h2 = jnp.dot(h1.astype(jnp.bfloat16), w2_ref[...],
                     preferred_element_type=jnp.float32)
        h2 = jnp.maximum(h2 + b2_ref[...], 0.0)                   # (TB, 64)
        # Regressor (64 -> 1): VPU multiply + lane reduction (avoids an N=1
        # MXU matmul with a nearly empty drain).
        y = jnp.sum(h2 * w3_ref[...], axis=-1, keepdims=True) + b3_ref[0, 0]
        if lane_dense:
            # One XLU relayout of the (TB, 1) column to a lane-dense (1, TB)
            # row so the output store is an unmasked, full-lane vst.
            o_ref[...] = y.T.astype(o_ref.dtype)                  # (1, TB)
        else:
            o_ref[...] = y.astype(o_ref.dtype)                    # (TB, 1)
    return kernel


def _plan_tiling(batch, input_dim):
    """Generation-aware TILE_B / vmem_limit selection."""
    try:
        info = pltpu.get_tpu_info()
        physical_vmem = int(getattr(info, "vmem_capacity_bytes", 64 << 20))
    except Exception:
        physical_vmem = 64 << 20          # v7x per-TensorCore; most conservative
    # ~40 MiB on 64 MiB (v7x) parts, ~80 MiB on 128 MiB (v5e/v6e) parts.
    vmem_cap = (physical_vmem * 5) // 8

    # Per-streamed-row VMEM working set (f32 x tile is the dominant term).
    bytes_per_row = (
        2 * input_dim * 4        # x tile, f32, double-buffered
        + input_dim * 2          # in-kernel bf16 copy of the x tile
        + 128 * (4 + 2)          # h1 f32 + bf16 copy for the layer-2 matmul
        + 64 * (4 + 4)           # h2 f32 + h2*w3 product
        + 2 * 4 + 16             # output row (double-buffered) + slack
    )
    # Weights/biases counted double-buffered (worst case if single-buffering
    # via pl.Buffered(1) is unavailable on this Pallas version).
    weight_bytes = 2 * (input_dim * 128 * 2 + 128 * 4
                        + 128 * 64 * 2 + 64 * 4 + 64 * 4)
    headroom = 4 << 20
    tile_budget = max(vmem_cap - weight_bytes - headroom, 4 << 20)

    tile = min(tile_budget // bytes_per_row, 32768)
    if tile >= batch:
        tile_b = batch                       # single full-array tile, no padding
    else:
        tile_b = max((tile // 128) * 128, 128)

    vmem_limit = int(min(max(weight_bytes + tile_b * bytes_per_row + headroom,
                             16 << 20), vmem_cap))
    return int(tile_b), vmem_limit


def _forward_impl(x, w1, b1, w2, b2, w3_row, b3, *, tile_b, vmem_limit, cost,
                  lane_dense, single_buffer_weights):
    B, D = x.shape
    num_tiles = pl.cdiv(B, tile_b)

    if single_buffer_weights:
        # Constant index_map -> fetched once; single buffer halves resident VMEM.
        resident = lambda shape: pl.BlockSpec(shape, lambda i: (0, 0),
                                              pipeline_mode=pl.Buffered(1))
    else:
        resident = lambda shape: pl.BlockSpec(shape, lambda i: (0, 0))

    if lane_dense:
        out_shape = jax.ShapeDtypeStruct((num_tiles, tile_b), jnp.float32)
        out_spec = pl.BlockSpec((1, tile_b), lambda i: (i, 0))
    else:
        out_shape = jax.ShapeDtypeStruct((num_tiles * tile_b, 1), jnp.float32)
        out_spec = pl.BlockSpec((tile_b, 1), lambda i: (i, 0))

    out = pl.pallas_call(
        _make_kernel(lane_dense),
        out_shape=out_shape,
        grid=(num_tiles,),
        in_specs=[
            pl.BlockSpec((tile_b, D), lambda i: (i, 0)),        # x, streamed f32
            resident(w1.shape), resident(b1.shape),             # layer 1
            resident(w2.shape), resident(b2.shape),             # layer 2
            resident(w3_row.shape),                             # regressor row
            pl.BlockSpec(memory_space=pltpu.MemorySpace.SMEM),  # b3 scalar
        ],
        out_specs=out_spec,
        # TODO(synk): on v7x, verify in a trace that the batch axis is split
        # across both TensorCores; if not, switch to pltpu.CORE_PARALLEL.
        compiler_params=pltpu.CompilerParams(
            dimension_semantics=("parallel",),
            vmem_limit_bytes=int(vmem_limit),
        ),
        cost_estimate=cost,
    )(x, w1, b1, w2, b2, w3_row, b3)

    # Flatten tiles back to (B, 1); rows >= B (partial last tile) are garbage
    # computed from out-of-bounds reads and are dropped here.
    return out.reshape(-1, 1)[:B]


def ic_transfer_forward(x, params):
    """x: (B, D) float32.  params: dict of f32 weights/biases.  Returns (B, 1)."""
    B, D = x.shape
    if x.dtype != jnp.float32:
        x = x.astype(jnp.float32)

    w1 = params["w1"].astype(jnp.bfloat16)               # (D, 128)
    b1 = params["b1"].astype(jnp.float32)                # (1, 128)
    w2 = params["w2"].astype(jnp.bfloat16)               # (128, 64)
    b2 = params["b2"].astype(jnp.float32)                # (1, 64)
    w3_row = params["w3"].astype(jnp.float32).T          # (1, 64) from (64, 1)
    b3 = params["b3"].astype(jnp.float32).reshape(1, 1)  # scalar bias -> SMEM

    tile_b, vmem_limit = _plan_tiling(B, D)
    cost = pl.CostEstimate(
        flops=2 * B * (D * 128 + 128 * 64 + 64),
        transcendentals=0,
        bytes_accessed=B * D * 4 + B * 4 + w1.size * 2 + w2.size * 2
        + (b1.size + b2.size + w3_row.size + 1) * 4,
    )

    args = (x, w1, b1, w2, b2, w3_row, b3)
    try:
        return _forward_impl(*args, tile_b=tile_b, vmem_limit=vmem_limit,
                             cost=cost, lane_dense=True,
                             single_buffer_weights=True)
    except Exception:
        # TODO(synk): drop this fallback once pl.Buffered(1) on pallas_call
        # BlockSpecs and the (TB,1)->(1,TB) lane-dense store are confirmed
        # supported on the deployed jax/Mosaic version.
        return _forward_impl(*args, tile_b=tile_b, vmem_limit=vmem_limit,
                             cost=cost, lane_dense=False,
                             single_buffer_weights=False)


def init_params(input_dim, key):
    """Deterministic init mimicking PyTorch's default U(-1/sqrt(fan_in), +)."""
    keys = jax.random.split(key, 6)

    def linear(kw, kb, fan_in, fan_out):
        bound = 1.0 / jnp.sqrt(jnp.float32(fan_in))
        w = jax.random.uniform(kw, (fan_in, fan_out), jnp.float32, -bound, bound)
        b = jax.random.uniform(kb, (1, fan_out), jnp.float32, -bound, bound)
        return w, b

    w1, b1 = linear(keys[0], keys[1], input_dim, 128)
    w2, b2 = linear(keys[2], keys[3], 128, 64)
    w3, b3 = linear(keys[4], keys[5], 64, 1)
    return {"w1": w1, "b1": b1, "w2": w2, "b2": b2, "w3": w3, "b3": b3}


def reference_forward(x, p):
    # Mirrors the kernel's bf16-on-MXU / f32-accumulate numerics.
    h = jnp.dot(x.astype(jnp.bfloat16), p["w1"].astype(jnp.bfloat16),
                preferred_element_type=jnp.float32) + p["b1"]
    h = jnp.maximum(h, 0.0)
    h = jnp.dot(h.astype(jnp.bfloat16), p["w2"].astype(jnp.bfloat16),
                preferred_element_type=jnp.float32) + p["b2"]
    h = jnp.maximum(h, 0.0)
    return jnp.dot(h, p["w3"], preferred_element_type=jnp.float32) + p["b3"]


if __name__ == "__main__":
    key = jax.random.PRNGKey(0)
    k_x, k_p = jax.random.split(key)

    batch, input_dim = 8, 32
    x = jax.random.normal(k_x, (batch, input_dim), jnp.float32)
    params = init_params(input_dim, k_p)

    out = ic_transfer_forward(x, params)
    out = jax.block_until_ready(out)

    ref = reference_forward(x, params)
    assert out.shape == (batch, 1)
    assert jnp.allclose(out, ref, atol=1e-2, rtol=1e-2), "mismatch vs reference"

    print("KERNEL_OK")
</pallas_src>

<mosaic_0001>
module attributes {stable_mosaic.version = 11 : i64} {
  func.func @kernel(%arg0: i32, %arg1: memref<8x32xf32, #tpu.memory_space<vmem>>, %arg2: memref<32x128xbf16, #tpu.memory_space<vmem>>, %arg3: memref<1x128xf32, #tpu.memory_space<vmem>>, %arg4: memref<128x64xbf16, #tpu.memory_space<vmem>>, %arg5: memref<1x64xf32, #tpu.memory_space<vmem>>, %arg6: memref<1x64xf32, #tpu.memory_space<vmem>>, %arg7: memref<1x1xf32, #tpu.memory_space<smem>>, %arg8: memref<1x8xf32, #tpu.memory_space<vmem>>) attributes {dimension_semantics = [#tpu.dimension_semantics<parallel>], iteration_bounds = array<i64: 1>, scalar_prefetch = 0 : i64, scratch_operands = 0 : i64, tpu.core_type = #tpu.core_type<tc>, window_params = [{transform_indices = @transform_0, window_bounds = array<i64: 8, 32>}, {pipeline_mode = #tpu.pipeline_mode<synchronous>, transform_indices = @transform_1, window_bounds = array<i64: 32, 128>}, {pipeline_mode = #tpu.pipeline_mode<synchronous>, transform_indices = @transform_2, window_bounds = array<i64: 1, 128>}, {pipeline_mode = #tpu.pipeline_mode<synchronous>, transform_indices = @transform_3, window_bounds = array<i64: 128, 64>}, {pipeline_mode = #tpu.pipeline_mode<synchronous>, transform_indices = @transform_4, window_bounds = array<i64: 1, 64>}, {pipeline_mode = #tpu.pipeline_mode<synchronous>, transform_indices = @transform_5, window_bounds = array<i64: 1, 64>}, {transform_indices = @transform_6, window_bounds = array<i64: 1, 1>}, {transform_indices = @transform_7, window_bounds = array<i64: 1, 8>}]} {
    %c0 = arith.constant 0 : index
    %c0_0 = arith.constant 0 : index
    %0 = vector.load %arg1[%c0, %c0_0] : memref<8x32xf32, #tpu.memory_space<vmem>>, vector<8x32xf32>
    %1 = arith.truncf %0 : vector<8x32xf32> to vector<8x32xbf16>
    %c0_1 = arith.constant 0 : index
    %c0_2 = arith.constant 0 : index
    %2 = vector.load %arg2[%c0_1, %c0_2] : memref<32x128xbf16, #tpu.memory_space<vmem>>, vector<32x128xbf16>
    %cst = arith.constant dense<0.000000e+00> : vector<8x128xf32>
    %3 = tpu.matmul %1, %2, %cst {dimension_numbers = #tpu.dot_dimension_numbers<[1], [0], [0], [1], [0, 0, 1, 1], [], []>} : vector<8x32xbf16>, vector<32x128xbf16>, vector<8x128xf32> -> vector<8x128xf32>
    %c0_3 = arith.constant 0 : index
    %c0_4 = arith.constant 0 : index
    %4 = vector.load %arg3[%c0_3, %c0_4] : memref<1x128xf32, #tpu.memory_space<vmem>>, vector<1x128xf32>
    %5 = vector.broadcast %4 : vector<1x128xf32> to vector<8x128xf32>
    %6 = arith.addf %3, %5 : vector<8x128xf32>
    %cst_5 = arith.constant 0.000000e+00 : f32
    %7 = vector.broadcast %cst_5 : f32 to vector<8x128xf32>
    %8 = arith.maximumf %6, %7 : vector<8x128xf32>
    %9 = arith.truncf %8 : vector<8x128xf32> to vector<8x128xbf16>
    %c0_6 = arith.constant 0 : index
    %c0_7 = arith.constant 0 : index
    %10 = vector.load %arg4[%c0_6, %c0_7] : memref<128x64xbf16, #tpu.memory_space<vmem>>, vector<128x64xbf16>
    %cst_8 = arith.constant dense<0.000000e+00> : vector<8x64xf32>
    %11 = tpu.matmul %9, %10, %cst_8 {dimension_numbers = #tpu.dot_dimension_numbers<[1], [0], [0], [1], [0, 0, 1, 1], [], []>} : vector<8x128xbf16>, vector<128x64xbf16>, vector<8x64xf32> -> vector<8x64xf32>
    %c0_9 = arith.constant 0 : index
    %c0_10 = arith.constant 0 : index
    %12 = vector.load %arg5[%c0_9, %c0_10] : memref<1x64xf32, #tpu.memory_space<vmem>>, vector<1x64xf32>
    %13 = vector.broadcast %12 : vector<1x64xf32> to vector<8x64xf32>
    %14 = arith.addf %11, %13 : vector<8x64xf32>
    %cst_11 = arith.constant 0.000000e+00 : f32
    %15 = vector.broadcast %cst_11 : f32 to vector<8x64xf32>
    %16 = arith.maximumf %14, %15 : vector<8x64xf32>
    %c0_12 = arith.constant 0 : index
    %c0_13 = arith.constant 0 : index
    %17 = vector.load %arg6[%c0_12, %c0_13] : memref<1x64xf32, #tpu.memory_space<vmem>>, vector<1x64xf32>
    %18 = vector.broadcast %17 : vector<1x64xf32> to vector<8x64xf32>
    %19 = arith.mulf %16, %18 : vector<8x64xf32>
    %cst_14 = arith.constant dense<0.000000e+00> : vector<8xf32>
    %20 = vector.multi_reduction <add>, %19, %cst_14 [1] : vector<8x64xf32> to vector<8xf32>
    %21 = vector.shape_cast %20 : vector<8xf32> to vector<8x1xf32>
    %c0_15 = arith.constant 0 : index
    %c0_16 = arith.constant 0 : index
    %22 = memref.load %arg7[%c0_15, %c0_16] : memref<1x1xf32, #tpu.memory_space<smem>>
    %23 = vector.broadcast %22 : f32 to vector<8x1xf32>
    %24 = arith.addf %21, %23 : vector<8x1xf32>
    %25 = tpu.transpose %24, [1, 0] : vector<8x1xf32> -> vector<1x8xf32>
    %c0_17 = arith.constant 0 : index
    %c0_18 = arith.constant 0 : index
    %26 = vector.load %arg8[%c0_17, %c0_18] : memref<1x8xf32, #tpu.memory_space<vmem>>, vector<1x8xf32>
    tpu.vector_store %arg8[%c0_17, %c0_18], %25 {strides = array<i32>} : memref<1x8xf32, #tpu.memory_space<vmem>>, vector<1x8xf32>,
    return
  }
  func.func @transform_0(%arg0: i32) -> (i32, i32) {
    %c0_i32 = arith.constant 0 : i32
    %c0_i32_0 = arith.constant 0 : i32
    return %arg0, %c0_i32 : i32, i32
  }
  func.func @transform_1(%arg0: i32) -> (i32, i32) {
    %c0_i32 = arith.constant 0 : i32
    %c0_i32_0 = arith.constant 0 : i32
    %c0_i32_1 = arith.constant 0 : i32
    return %c0_i32, %c0_i32_0 : i32, i32
  }
  func.func @transform_2(%arg0: i32) -> (i32, i32) {
    %c0_i32 = arith.constant 0 : i32
    %c0_i32_0 = arith.constant 0 : i32
    %c0_i32_1 = arith.constant 0 : i32
    return %c0_i32, %c0_i32_0 : i32, i32
  }
  func.func @transform_3(%arg0: i32) -> (i32, i32) {
    %c0_i32 = arith.constant 0 : i32
    %c0_i32_0 = arith.constant 0 : i32
    %c0_i32_1 = arith.constant 0 : i32
    return %c0_i32, %c0_i32_0 : i32, i32
  }
  func.func @transform_4(%arg0: i32) -> (i32, i32) {
    %c0_i32 = arith.constant 0 : i32
    %c0_i32_0 = arith.constant 0 : i32
    %c0_i32_1 = arith.constant 0 : i32
    return %c0_i32, %c0_i32_0 : i32, i32
  }
  func.func @transform_5(%arg0: i32) -> (i32, i32) {
    %c0_i32 = arith.constant 0 : i32
    %c0_i32_0 = arith.constant 0 : i32
    %c0_i32_1 = arith.constant 0 : i32
    return %c0_i32, %c0_i32_0 : i32, i32
  }
  func.func @transform_6(%arg0: i32) -> (i32, i32) {
    %c0_i32 = arith.constant 0 : i32
    %c0_i32_0 = arith.constant 0 : i32
    %c0_i32_1 = arith.constant 0 : i32
    return %c0_i32, %c0_i32_0 : i32, i32
  }
  func.func @transform_7(%arg0: i32) -> (i32, i32) {
    %c0_i32 = arith.constant 0 : i32
    %c0_i32_0 = arith.constant 0 : i32
    return %arg0, %c0_i32 : i32, i32
  }
}

module attributes {stable_mosaic.version = 11 : i64} {
  func.func @kernel(%arg0: i32, %arg1: memref<8x32xf32, #tpu.memory_space<vmem>>, %arg2: memref<32x128xbf16, #tpu.memory_space<vmem>>, %arg3: memref<1x128xf32, #tpu.memory_space<vmem>>, %arg4: memref<128x64xbf16, #tpu.memory_space<vmem>>, %arg5: memref<1x64xf32, #tpu.memory_space<vmem>>, %arg6: memref<1x64xf32, #tpu.memory_space<vmem>>, %arg7: memref<1x1xf32, #tpu.memory_space<smem>>, %arg8: memref<8x1xf32, #tpu.memory_space<vmem>>) attributes {dimension_semantics = [#tpu.dimension_semantics<parallel>], iteration_bounds = array<i64: 1>, scalar_prefetch = 0 : i64, scratch_operands = 0 : i64, tpu.core_type = #tpu.core_type<tc>, window_params = [{transform_indices = @transform_0, window_bounds = array<i64: 8, 32>}, {pipeline_mode = #tpu.pipeline_mode<synchronous>, transform_indices = @transform_1, window_bounds = array<i64: 32, 128>}, {pipeline_mode = #tpu.pipeline_mode<synchronous>, transform_indices = @transform_2, window_bounds = array<i64: 1, 128>}, {pipeline_mode = #tpu.pipeline_mode<synchronous>, transform_indices = @transform_3, window_bounds = array<i64: 128, 64>}, {pipeline_mode = #tpu.pipeline_mode<synchronous>, transform_indices = @transform_4, window_bounds = array<i64: 1, 64>}, {pipeline_mode = #tpu.pipeline_mode<synchronous>, transform_indices = @transform_5, window_bounds = array<i64: 1, 64>}, {transform_indices = @transform_6, window_bounds = array<i64: 1, 1>}, {transform_indices = @transform_7, window_bounds = array<i64: 8, 1>}]} {
    %c0 = arith.constant 0 : index
    %c0_0 = arith.constant 0 : index
    %0 = vector.load %arg1[%c0, %c0_0] : memref<8x32xf32, #tpu.memory_space<vmem>>, vector<8x32xf32>
    %1 = arith.truncf %0 : vector<8x32xf32> to vector<8x32xbf16>
    %c0_1 = arith.constant 0 : index
    %c0_2 = arith.constant 0 : index
    %2 = vector.load %arg2[%c0_1, %c0_2] : memref<32x128xbf16, #tpu.memory_space<vmem>>, vector<32x128xbf16>
    %cst = arith.constant dense<0.000000e+00> : vector<8x128xf32>
    %3 = tpu.matmul %1, %2, %cst {dimension_numbers = #tpu.dot_dimension_numbers<[1], [0], [0], [1], [0, 0, 1, 1], [], []>} : vector<8x32xbf16>, vector<32x128xbf16>, vector<8x128xf32> -> vector<8x128xf32>
    %c0_3 = arith.constant 0 : index
    %c0_4 = arith.constant 0 : index
    %4 = vector.load %arg3[%c0_3, %c0_4] : memref<1x128xf32, #tpu.memory_space<vmem>>, vector<1x128xf32>
    %5 = vector.broadcast %4 : vector<1x128xf32> to vector<8x128xf32>
    %6 = arith.addf %3, %5 : vector<8x128xf32>
    %cst_5 = arith.constant 0.000000e+00 : f32
    %7 = vector.broadcast %cst_5 : f32 to vector<8x128xf32>
    %8 = arith.maximumf %6, %7 : vector<8x128xf32>
    %9 = arith.truncf %8 : vector<8x128xf32> to vector<8x128xbf16>
    %c0_6 = arith.constant 0 : index
    %c0_7 = arith.constant 0 : index
    %10 = vector.load %arg4[%c0_6, %c0_7] : memref<128x64xbf16, #tpu.memory_space<vmem>>, vector<128x64xbf16>
    %cst_8 = arith.constant dense<0.000000e+00> : vector<8x64xf32>
    %11 = tpu.matmul %9, %10, %cst_8 {dimension_numbers = #tpu.dot_dimension_numbers<[1], [0], [0], [1], [0, 0, 1, 1], [], []>} : vector<8x128xbf16>, vector<128x64xbf16>, vector<8x64xf32> -> vector<8x64xf32>
    %c0_9 = arith.constant 0 : index
    %c0_10 = arith.constant 0 : index
    %12 = vector.load %arg5[%c0_9, %c0_10] : memref<1x64xf32, #tpu.memory_space<vmem>>, vector<1x64xf32>
    %13 = vector.broadcast %12 : vector<1x64xf32> to vector<8x64xf32>
    %14 = arith.addf %11, %13 : vector<8x64xf32>
    %cst_11 = arith.constant 0.000000e+00 : f32
    %15 = vector.broadcast %cst_11 : f32 to vector<8x64xf32>
    %16 = arith.maximumf %14, %15 : vector<8x64xf32>
    %c0_12 = arith.constant 0 : index
    %c0_13 = arith.constant 0 : index
    %17 = vector.load %arg6[%c0_12, %c0_13] : memref<1x64xf32, #tpu.memory_space<vmem>>, vector<1x64xf32>
    %18 = vector.broadcast %17 : vector<1x64xf32> to vector<8x64xf32>
    %19 = arith.mulf %16, %18 : vector<8x64xf32>
    %cst_14 = arith.constant dense<0.000000e+00> : vector<8xf32>
    %20 = vector.multi_reduction <add>, %19, %cst_14 [1] : vector<8x64xf32> to vector<8xf32>
    %21 = vector.shape_cast %20 : vector<8xf32> to vector<8x1xf32>
    %c0_15 = arith.constant 0 : index
    %c0_16 = arith.constant 0 : index
    %22 = memref.load %arg7[%c0_15, %c0_16] : memref<1x1xf32, #tpu.memory_space<smem>>
    %23 = vector.broadcast %22 : f32 to vector<8x1xf32>
    %24 = arith.addf %21, %23 : vector<8x1xf32>
    %c0_17 = arith.constant 0 : index
    %c0_18 = arith.constant 0 : index
    %25 = vector.load %arg8[%c0_17, %c0_18] : memref<8x1xf32, #tpu.memory_space<vmem>>, vector<8x1xf32>
    tpu.vector_store %arg8[%c0_17, %c0_18], %24 {strides = array<i32>} : memref<8x1xf32, #tpu.memory_space<vmem>>, vector<8x1xf32>,
    return
  }
  func.func @transform_0(%arg0: i32) -> (i32, i32) {
    %c0_i32 = arith.constant 0 : i32
    %c0_i32_0 = arith.constant 0 : i32
    return %arg0, %c0_i32 : i32, i32
  }
  func.func @transform_1(%arg0: i32) -> (i32, i32) {
    %c0_i32 = arith.constant 0 : i32
    %c0_i32_0 = arith.constant 0 : i32
    %c0_i32_1 = arith.constant 0 : i32
    return %c0_i32, %c0_i32_0 : i32, i32
  }
  func.func @transform_2(%arg0: i32) -> (i32, i32) {
    %c0_i32 = arith.constant 0 : i32
    %c0_i32_0 = arith.constant 0 : i32
    %c0_i32_1 = arith.constant 0 : i32
    return %c0_i32, %c0_i32_0 : i32, i32
  }
  func.func @transform_3(%arg0: i32) -> (i32, i32) {
    %c0_i32 = arith.constant 0 : i32
    %c0_i32_0 = arith.constant 0 : i32
    %c0_i32_1 = arith.constant 0 : i32
    return %c0_i32, %c0_i32_0 : i32, i32
  }
  func.func @transform_4(%arg0: i32) -> (i32, i32) {
    %c0_i32 = arith.constant 0 : i32
    %c0_i32_0 = arith.constant 0 : i32
    %c0_i32_1 = arith.constant 0 : i32
    return %c0_i32, %c0_i32_0 : i32, i32
  }
  func.func @transform_5(%arg0: i32) -> (i32, i32) {
    %c0_i32 = arith.constant 0 : i32
    %c0_i32_0 = arith.constant 0 : i32
    %c0_i32_1 = arith.constant 0 : i32
    return %c0_i32, %c0_i32_0 : i32, i32
  }
  func.func @transform_6(%arg0: i32) -> (i32, i32) {
    %c0_i32 = arith.constant 0 : i32
    %c0_i32_0 = arith.constant 0 : i32
    %c0_i32_1 = arith.constant 0 : i32
    return %c0_i32, %c0_i32_0 : i32, i32
  }
  func.func @transform_7(%arg0: i32) -> (i32, i32) {
    %c0_i32 = arith.constant 0 : i32
    %c0_i32_0 = arith.constant 0 : i32
    return %arg0, %c0_i32 : i32, i32
  }
}

</mosaic_0001>

<llo_original>
// kernel: tpu_custom_call.1
$region0: #{tpu_custom_call.1}
  #allocation0 [shape = 'u32[]', space=smem, size = 0x4, offset = 0x4, fixed_abs, tag = 'smem constant byte address 0x4 - core index']
  #allocation1 [shape = 'u32[144,128]{1,0:T(1,128)}', space=vmem, size = 0x12000, scoped, tag = 'internal scratch']
  #allocation2 [shape = 'f32[1,1]{1,0:T(1,128)S(6)}', space=smem, size = 0x200, scoped, tag = 'scoped memory for tpu_custom_call.1']
  %s0 = inlined_call_operand.vmem [shape: f32[8,32], index: 0, kind: input, shape index: {}]
  %s1 = inlined_call_operand.vmem [shape: bf16[32,128], index: 1, kind: input, shape index: {}]
  %s2 = inlined_call_operand.vmem [shape: f32[1,128], index: 2, kind: input, shape index: {}]
  %s3 = inlined_call_operand.vmem [shape: bf16[128,64], index: 3, kind: input, shape index: {}]
  %s4 = inlined_call_operand.vmem [shape: f32[1,64], index: 4, kind: input, shape index: {}]
  %s5 = inlined_call_operand.vmem [shape: f32[1,64], index: 5, kind: input, shape index: {}]
  %s6 = inlined_call_operand.<no memory space> [shape: f32[1,1], index: 6, kind: input, shape index: {}]
  %s7 = inlined_call_operand.hbm [shape: f32[1,8], index: 7, kind: output, shape index: {}]
  %s8 = sld [smem:[#allocation0]]
  $region38: #{tpu_custom_call.1} parent=0
    _
  %s10 = ssub.s32 1, %s8
  %s11 = scalar_select 0, %s10, %s8
  %12 = sst [smem:[#allocation2]] %s6
  $region1: #{tpu_custom_call.1} parent=0
    #allocation3 [shape = 'u8[512]{0}', space=vmem, size = 0x400, scoped, tag = 'output window, operand 0, single buffered']
    #allocation4 [shape = 's32[1]{0}', space=sflag, size = 0x4, scoped, tag = 'scoped memory for tpu_custom_call.1']
    %13 = vsyncpa [#allocation4], 0
    // Predicated region
    $region2: #{tpu_custom_call.1} parent=1 // pred_check
      _
    $region3: #{tpu_custom_call.1} parent=1 // pred_check_branch
      %15 = sbr.rel (0) target = $region5
    $region4: #{tpu_custom_call.1} parent=1 // pred_region
      _
    $region5: #{tpu_custom_call.1} parent=1 // pred_fallthru
      _
    // Predicated region
    $region6: #{tpu_custom_call.1} parent=1 // pred_check
      _
    $region7: #{tpu_custom_call.1} parent=1 // pred_check_branch
      %17 = sbr.rel (0) target = $region9
    $region8: #{tpu_custom_call.1} parent=1 // pred_region
      _
    $region9: #{tpu_custom_call.1} parent=1 // pred_fallthru
      _
    // Predicated region
    $region10: #{tpu_custom_call.1} parent=1 // pred_check
      _
    $region11: #{tpu_custom_call.1} parent=1 // pred_check_branch
      %19 = sbr.rel (0) target = $region13
    $region12: #{tpu_custom_call.1} parent=1 // pred_region
      _
    $region13: #{tpu_custom_call.1} parent=1 // pred_fallthru
      _
    // Predicated region
    $region14: #{tpu_custom_call.1} parent=1 // pred_check
      _
    $region15: #{tpu_custom_call.1} parent=1 // pred_check_branch
      %21 = sbr.rel (0) target = $region17
    $region16: #{tpu_custom_call.1} parent=1 // pred_region
      _
    $region17: #{tpu_custom_call.1} parent=1 // pred_fallthru
      _
    // Predicated region
    $region18: #{tpu_custom_call.1} parent=1 // pred_check
      _
    $region19: #{tpu_custom_call.1} parent=1 // pred_check_branch
      %23 = sbr.rel (0) target = $region21
    $region20: #{tpu_custom_call.1} parent=1 // pred_region
      _
    $region21: #{tpu_custom_call.1} parent=1 // pred_fallthru
      _
    // Predicated region
    $region22: #{tpu_custom_call.1} parent=1 // pred_check
      _
    $region23: #{tpu_custom_call.1} parent=1 // pred_check_branch
      %25 = sbr.rel (0) target = $region25
    $region24: #{tpu_custom_call.1} parent=1 // pred_region
      _
    $region25: #{tpu_custom_call.1} parent=1 // pred_fallthru
      _
    // Predicated region
    $region26: #{tpu_custom_call.1} parent=1 // pred_check
      _
    $region27: #{tpu_custom_call.1} parent=1 // pred_check_branch
      %27 = sbr.rel (0) target = $region29
    $region28: #{tpu_custom_call.1} parent=1 // pred_region
      _
    $region29: #{tpu_custom_call.1} parent=1 // pred_fallthru
      _
    %v29 = vld [vmem:[%s0] sm:$0xff]
    %v30 = vpack.c.bf16 %v29, %v29
    %v31 = vld [vmem:[%s1] sm:$0xf]
    %v32 = vld [vmem:[%s1 + $0x4] sm:$0xf]
    %v33 = vld [vmem:[%s1 + $0x8] sm:$0xf]
    %v34 = vld [vmem:[%s1 + $0xc] sm:$0xf]
    %v35 = vld [vmem:[%s2] sm:$0x1]
    %v37 = vlaneseq
    %v38 = vshrl.u32 %v37, 7
    %v39 = vsub.s32 0, %v38
    %v40 = vrot.slane %v35, %v39
    %v46 = vunpack.c.l.b16 %v31
    %v47 = vunpack.c.l.b16 %v32
    %v48 = vunpack.c.l.b16 %v33
    %v49 = vunpack.c.l.b16 %v34
    %v50 = vpack.c.b16 %v47, %v46
    %v51 = vpack.c.b16 %v49, %v48
    %vm54 = vcmask 261120
    %v56 = vsel %vm54, %v30, 0
    %58 = vmatprep.subr.bf16.mxu0 0
    %59 = vmatpush1.bf16.msra.mxu0 0
    %60 = vmatprep.subr.bf16.mxu0 0
    %61 = vmatpush1.bf16.msra.mxu0 0
    %62 = vmatprep.subr.bf16.mxu0 0
    %63 = vmatpush1.bf16.msra.mxu0 0
    %64 = vmatprep.subr.bf16.mxu0 0
    %65 = vmatpush1.bf16.msra.mxu0 0
    %66 = vmatprep.subr.bf16.mxu0 0
    %67 = vmatpush1.bf16.msra.mxu0 0
    %68 = vmatprep.subr.bf16.mxu0 0
    %69 = vmatpush1.bf16.msra.mxu0 0
    %70 = vmatprep.subr.bf16.mxu0 0
    %71 = vmatpush1.bf16.msra.mxu0 %v51
    %72 = vmatprep.subr.bf16.mxu0 0
    %73 = vmatpush1.bf16.msra.mxu0 %v50
    %74 = vmatprep.subr.bf16.mxu0 0
    %75 = vmatpush2.bf16.msra.mxu0 0
    %76 = vmatprep.subr.bf16.mxu0 0
    %77 = vmatpush2.bf16.msra.mxu0 0
    %78 = vmatprep.subr.bf16.mxu0 0
    %79 = vmatpush2.bf16.msra.mxu0 0
    %80 = vmatprep.subr.bf16.mxu0 0
    %81 = vmatpush2.bf16.msra.mxu0 0
    %82 = vmatprep.subr.bf16.mxu0 0
    %83 = vmatpush2.bf16.msra.mxu0 0
    %84 = vmatprep.subr.bf16.mxu0 0
    %85 = vmatpush2.bf16.msra.mxu0 0
    %86 = vmatprep.subr.bf16.mxu0 0
    %87 = vmatpush2.bf16.msra.mxu0 0
    %88 = vmatprep.subr.bf16.mxu0 0
    %89 = vmatpush2.bf16.msra.mxu0 0
    %90 = vmatprep.mubr.bf16.mxu0 0
    %91 = vmatmul.mubr.bf16.gmra.mxu0 %v56
    %v92 = vpop.f32.mrf.mxu0
    %v93 = vadd.f32 %v40, %v92
    %v94 = vpop.f32.mrf.mxu0
    %v95 = vpop.f32.mrf.mxu0
    %v96 = vpop.f32.mrf.mxu0
    %97 = vdwg.mxu0
    %v98 = vmax.f32 %v93, 0.0
    %v99 = vpack.c.bf16 %v98, %v98
    %v100 = vld [vmem:[%s3] sm:$0xf]
    %v101 = vld [vmem:[%s3 + $0x4] sm:$0xf]
    %v102 = vld [vmem:[%s3 + $0x8] sm:$0xf]
    %v103 = vld [vmem:[%s3 + $0xc] sm:$0xf]
    %v104 = vld [vmem:[%s3 + $0x10] sm:$0xf]
    %v105 = vld [vmem:[%s3 + $0x14] sm:$0xf]
    %v106 = vld [vmem:[%s3 + $0x18] sm:$0xf]
    %v107 = vld [vmem:[%s3 + $0x1c] sm:$0xf]
    %v108 = vld [vmem:[%s3 + $0x20] sm:$0xf]
    %v109 = vld [vmem:[%s3 + $0x24] sm:$0xf]
    %v110 = vld [vmem:[%s3 + $0x28] sm:$0xf]
    %v111 = vld [vmem:[%s3 + $0x2c] sm:$0xf]
    %v112 = vld [vmem:[%s3 + $0x30] sm:$0xf]
    %v113 = vld [vmem:[%s3 + $0x34] sm:$0xf]
    %v114 = vld [vmem:[%s3 + $0x38] sm:$0xf]
    %v115 = vld [vmem:[%s3 + $0x3c] sm:$0xf]
    %v116 = vld [vmem:[%s4] sm:$0x1]
    %v118 = vlaneseq
    %v119 = vshrl.u32 %v118, 7
    %v120 = vsub.s32 0, %v119
    %v121 = vrot.slane %v116, %v120
    %v139 = vunpack.c.l.b16 %v100
    %v140 = vunpack.c.l.b16 %v101
    %v141 = vunpack.c.l.b16 %v102
    %v142 = vunpack.c.l.b16 %v103
    %v143 = vunpack.c.l.b16 %v104
    %v144 = vunpack.c.l.b16 %v105
    %v145 = vunpack.c.l.b16 %v106
    %v146 = vunpack.c.l.b16 %v107
    %v147 = vunpack.c.l.b16 %v108
    %v148 = vunpack.c.l.b16 %v109
    %v149 = vunpack.c.l.b16 %v110
    %v150 = vunpack.c.l.b16 %v111
    %v151 = vunpack.c.l.b16 %v112
    %v152 = vunpack.c.l.b16 %v113
    %v153 = vunpack.c.l.b16 %v114
    %v154 = vunpack.c.l.b16 %v115
    %v155 = vpack.c.b16 %v140, %v139
    %v156 = vpack.c.b16 %v142, %v141
    %v157 = vpack.c.b16 %v144, %v143
    %v158 = vpack.c.b16 %v146, %v145
    %v159 = vpack.c.b16 %v148, %v147
    %v160 = vpack.c.b16 %v150, %v149
    %v161 = vpack.c.b16 %v152, %v151
    %v162 = vpack.c.b16 %v154, %v153
    %171 = vmatprep.subr.bf16.mxu0 0
    %172 = vmatpush1.bf16.msra.mxu0 %v162
    %173 = vmatprep.subr.bf16.mxu0 0
    %174 = vmatpush1.bf16.msra.mxu0 %v161
    %175 = vmatprep.subr.bf16.mxu0 0
    %176 = vmatpush1.bf16.msra.mxu0 %v160
    %177 = vmatprep.subr.bf16.mxu0 0
    %178 = vmatpush1.bf16.msra.mxu0 %v159
    %179 = vmatprep.subr.bf16.mxu0 0
    %180 = vmatpush1.bf16.msra.mxu0 %v158
    %181 = vmatprep.subr.bf16.mxu0 0
    %182 = vmatpush1.bf16.msra.mxu0 %v157
    %183 = vmatprep.subr.bf16.mxu0 0
    %184 = vmatpush1.bf16.msra.mxu0 %v156
    %185 = vmatprep.subr.bf16.mxu0 0
    %186 = vmatpush1.bf16.msra.mxu0 %v155
    %187 = vmatprep.subr.bf16.mxu0 0
    %188 = vmatpush2.bf16.msra.mxu0 0
    %189 = vmatprep.subr.bf16.mxu0 0
    %190 = vmatpush2.bf16.msra.mxu0 0
    %191 = vmatprep.subr.bf16.mxu0 0
    %192 = vmatpush2.bf16.msra.mxu0 0
    %193 = vmatprep.subr.bf16.mxu0 0
    %194 = vmatpush2.bf16.msra.mxu0 0
    %195 = vmatprep.subr.bf16.mxu0 0
    %196 = vmatpush2.bf16.msra.mxu0 0
    %197 = vmatprep.subr.bf16.mxu0 0
    %198 = vmatpush2.bf16.msra.mxu0 0
    %199 = vmatprep.subr.bf16.mxu0 0
    %200 = vmatpush2.bf16.msra.mxu0 0
    %201 = vmatprep.subr.bf16.mxu0 0
    %202 = vmatpush2.bf16.msra.mxu0 0
    %203 = vmatprep.mubr.bf16.mxu0 0
    %204 = vmatmul.mubr.bf16.gmra.mxu0 %v99
    %v205 = vpop.f32.mrf.mxu0
    %v206 = vadd.f32 %v121, %v205
    %v207 = vpop.f32.mrf.mxu0
    %v208 = vpop.f32.mrf.mxu0
    %v209 = vpop.f32.mrf.mxu0
    %210 = vdwg.mxu0
    %v211 = vmax.f32 %v206, 0.0
    %v212 = vld [vmem:[%s5] sm:$0x1]
    %v214 = vlaneseq
    %v215 = vshrl.u32 %v214, 7
    %v216 = vsub.s32 0, %v215
    %v217 = vrot.slane %v212, %v216
    %v219 = vmul.f32 %v211, %v217
    %vm220 = vcmask 523264
    %v221 = vsel %vm220, %v219, 0.0
    %222 = vadd.xlane.f32.xlu0 %v221
    %v223 = vpop.xlane.xlu0 %222
    %s224 = sld [smem:[#allocation2]]
    %v225 = vstv %s224
    %v226 = vadd.f32 %v223, %v225
    %227 = vxpose.xlu0.b32.start [1/16] %v226, 128
    %228 = vxpose.xlu0.b32.cont [2/16] 0.0, 128
    %229 = vxpose.xlu0.b32.cont [3/16] 0.0, 128
    %230 = vxpose.xlu0.b32.cont [4/16] 0.0, 128
    %231 = vxpose.xlu0.b32.cont [5/16] 0.0, 128
    %232 = vxpose.xlu0.b32.cont [6/16] 0.0, 128
    %233 = vxpose.xlu0.b32.cont [7/16] 0.0, 128
    %234 = vxpose.xlu0.b32.cont [8/16] 0.0, 128
    %235 = vxpose.xlu0.b32.cont [9/16] 0.0, 128
    %236 = vxpose.xlu0.b32.cont [10/16] 0.0, 128
    %237 = vxpose.xlu0.b32.cont [11/16] 0.0, 128
    %238 = vxpose.xlu0.b32.cont [12/16] 0.0, 128
    %239 = vxpose.xlu0.b32.cont [13/16] 0.0, 128
    %240 = vxpose.xlu0.b32.cont [14/16] 0.0, 128
    %241 = vxpose.xlu0.b32.cont [15/16] 0.0, 128
    %242 = vxpose.xlu0.b32.end [16/16] 0.0, 128
    %v243 = vpop.trf.xlu0
    %v244 = vpop.trf.xlu0
    %v245 = vpop.trf.xlu0
    %v246 = vpop.trf.xlu0
    %v247 = vpop.trf.xlu0
    %v248 = vpop.trf.xlu0
    %v249 = vpop.trf.xlu0
    %v250 = vpop.trf.xlu0
    %v251 = vpop.trf.xlu0
    %v252 = vpop.trf.xlu0
    %v253 = vpop.trf.xlu0
    %v254 = vpop.trf.xlu0
    %v255 = vpop.trf.xlu0
    %v256 = vpop.trf.xlu0
    %v257 = vpop.trf.xlu0
    %v258 = vpop.trf.xlu0
    %vm259 = vcmask 57344
    %260 = vst.msk [vmem:[#allocation3] sm:$0x1] %vm259, %v243
    // Predicated region
    $region30: #{tpu_custom_call.1} parent=1 // pred_check
      _
    $region31: #{tpu_custom_call.1} parent=1 // pred_check_branch
      %262 = sbr.rel (0) target = $region33
    $region32: #{tpu_custom_call.1} parent=1 // pred_region
      %s264 = ssub.s32 16, 16
      %265 = vsyncadd [#allocation4], %s264
      %s267 = sshll.u32 [#allocation3], 4
      %s268 = int_to_ptr.vmem [resolvable:$true] %s267
      %270 = dma.vmem_to_hbm [thread:$0]  %s268, 16, %s7, [#allocation4]
    $region33: #{tpu_custom_call.1} parent=1 // pred_fallthru
      _
    // Predicated region
    $region34: #{tpu_custom_call.1} parent=1 // pred_check
      _
    $region35: #{tpu_custom_call.1} parent=1 // pred_check_branch
      %272 = sbr.rel (0) target = $region37
    $region36: #{tpu_custom_call.1} parent=1 // pred_region
      %273 = dma.done [#allocation4], 16
    $region37: #{tpu_custom_call.1} parent=1 // pred_fallthru
      _
    %274 = vsyncpa [#allocation4], 1

// kernel: tpu_custom_call.1
$region0: #{tpu_custom_call.1}
  #allocation0 [shape = 'u32[]', space=smem, size = 0x4, offset = 0x4, fixed_abs, tag = 'smem constant byte address 0x4 - core index']
  #allocation1 [shape = 'u32[144,128]{1,0:T(1,128)}', space=vmem, size = 0x12000, scoped, tag = 'internal scratch']
  #allocation2 [shape = 'f32[1,1]{1,0:T(1,128)S(6)}', space=smem, size = 0x200, scoped, tag = 'scoped memory for tpu_custom_call.1']
  %s0 = inlined_call_operand.vmem [shape: f32[8,32], index: 0, kind: input, shape index: {}]
  %s1 = inlined_call_operand.vmem [shape: bf16[32,128], index: 1, kind: input, shape index: {}]
  %s2 = inlined_call_operand.vmem [shape: f32[1,128], index: 2, kind: input, shape index: {}]
  %s3 = inlined_call_operand.vmem [shape: bf16[128,64], index: 3, kind: input, shape index: {}]
  %s4 = inlined_call_operand.vmem [shape: f32[1,64], index: 4, kind: input, shape index: {}]
  %s5 = inlined_call_operand.vmem [shape: f32[1,64], index: 5, kind: input, shape index: {}]
  %s6 = inlined_call_operand.<no memory space> [shape: f32[1,1], index: 6, kind: input, shape index: {}]
  %s7 = inlined_call_operand.vmem [shape: f32[8,1], index: 7, kind: output, shape index: {}]
  %s8 = sld [smem:[#allocation0]]
  $region38: #{tpu_custom_call.1} parent=0
    _
  %s10 = ssub.s32 1, %s8
  %s11 = scalar_select 0, %s10, %s8
  %12 = sst [smem:[#allocation2]] %s6
  // Predicated region
  $region2: #{tpu_custom_call.1} parent=0 // pred_check
    _
  $region3: #{tpu_custom_call.1} parent=0 // pred_check_branch
    %14 = sbr.rel (0) target = $region5
  $region4: #{tpu_custom_call.1} parent=0 // pred_region
    _
  $region5: #{tpu_custom_call.1} parent=0 // pred_fallthru
    _
  // Predicated region
  $region6: #{tpu_custom_call.1} parent=0 // pred_check
    _
  $region7: #{tpu_custom_call.1} parent=0 // pred_check_branch
    %16 = sbr.rel (0) target = $region9
  $region8: #{tpu_custom_call.1} parent=0 // pred_region
    _
  $region9: #{tpu_custom_call.1} parent=0 // pred_fallthru
    _
  // Predicated region
  $region10: #{tpu_custom_call.1} parent=0 // pred_check
    _
  $region11: #{tpu_custom_call.1} parent=0 // pred_check_branch
    %18 = sbr.rel (0) target = $region13
  $region12: #{tpu_custom_call.1} parent=0 // pred_region
    _
  $region13: #{tpu_custom_call.1} parent=0 // pred_fallthru
    _
  // Predicated region
  $region14: #{tpu_custom_call.1} parent=0 // pred_check
    _
  $region15: #{tpu_custom_call.1} parent=0 // pred_check_branch
    %20 = sbr.rel (0) target = $region17
  $region16: #{tpu_custom_call.1} parent=0 // pred_region
    _
  $region17: #{tpu_custom_call.1} parent=0 // pred_fallthru
    _
  // Predicated region
  $region18: #{tpu_custom_call.1} parent=0 // pred_check
    _
  $region19: #{tpu_custom_call.1} parent=0 // pred_check_branch
    %22 = sbr.rel (0) target = $region21
  $region20: #{tpu_custom_call.1} parent=0 // pred_region
    _
  $region21: #{tpu_custom_call.1} parent=0 // pred_fallthru
    _
  // Predicated region
  $region22: #{tpu_custom_call.1} parent=0 // pred_check
    _
  $region23: #{tpu_custom_call.1} parent=0 // pred_check_branch
    %24 = sbr.rel (0) target = $region25
  $region24: #{tpu_custom_call.1} parent=0 // pred_region
    _
  $region25: #{tpu_custom_call.1} parent=0 // pred_fallthru
    _
  // Predicated region
  $region26: #{tpu_custom_call.1} parent=0 // pred_check
    _
  $region27: #{tpu_custom_call.1} parent=0 // pred_check_branch
    %26 = sbr.rel (0) target = $region29
  $region28: #{tpu_custom_call.1} parent=0 // pred_region
    _
  $region29: #{tpu_custom_call.1} parent=0 // pred_fallthru
    _
  %v28 = vld [vmem:[%s0] sm:$0xff]
  %v29 = vpack.c.bf16 %v28, %v28
  %v30 = vld [vmem:[%s1] sm:$0xf]
  %v31 = vld [vmem:[%s1 + $0x4] sm:$0xf]
  %v32 = vld [vmem:[%s1 + $0x8] sm:$0xf]
  %v33 = vld [vmem:[%s1 + $0xc] sm:$0xf]
  %v34 = vld [vmem:[%s2] sm:$0x1]
  %v36 = vlaneseq
  %v37 = vshrl.u32 %v36, 7
  %v38 = vsub.s32 0, %v37
  %v39 = vrot.slane %v34, %v38
  %v45 = vunpack.c.l.b16 %v30
  %v46 = vunpack.c.l.b16 %v31
  %v47 = vunpack.c.l.b16 %v32
  %v48 = vunpack.c.l.b16 %v33
  %v49 = vpack.c.b16 %v46, %v45
  %v50 = vpack.c.b16 %v48, %v47
  %vm53 = vcmask 261120
  %v55 = vsel %vm53, %v29, 0
  %57 = vmatprep.subr.bf16.mxu0 0
  %58 = vmatpush1.bf16.msra.mxu0 0
  %59 = vmatprep.subr.bf16.mxu0 0
  %60 = vmatpush1.bf16.msra.mxu0 0
  %61 = vmatprep.subr.bf16.mxu0 0
  %62 = vmatpush1.bf16.msra.mxu0 0
  %63 = vmatprep.subr.bf16.mxu0 0
  %64 = vmatpush1.bf16.msra.mxu0 0
  %65 = vmatprep.subr.bf16.mxu0 0
  %66 = vmatpush1.bf16.msra.mxu0 0
  %67 = vmatprep.subr.bf16.mxu0 0
  %68 = vmatpush1.bf16.msra.mxu0 0
  %69 = vmatprep.subr.bf16.mxu0 0
  %70 = vmatpush1.bf16.msra.mxu0 %v50
  %71 = vmatprep.subr.bf16.mxu0 0
  %72 = vmatpush1.bf16.msra.mxu0 %v49
  %73 = vmatprep.subr.bf16.mxu0 0
  %74 = vmatpush2.bf16.msra.mxu0 0
  %75 = vmatprep.subr.bf16.mxu0 0
  %76 = vmatpush2.bf16.msra.mxu0 0
  %77 = vmatprep.subr.bf16.mxu0 0
  %78 = vmatpush2.bf16.msra.mxu0 0
  %79 = vmatprep.subr.bf16.mxu0 0
  %80 = vmatpush2.bf16.msra.mxu0 0
  %81 = vmatprep.subr.bf16.mxu0 0
  %82 = vmatpush2.bf16.msra.mxu0 0
  %83 = vmatprep.subr.bf16.mxu0 0
  %84 = vmatpush2.bf16.msra.mxu0 0
  %85 = vmatprep.subr.bf16.mxu0 0
  %86 = vmatpush2.bf16.msra.mxu0 0
  %87 = vmatprep.subr.bf16.mxu0 0
  %88 = vmatpush2.bf16.msra.mxu0 0
  %89 = vmatprep.mubr.bf16.mxu0 0
  %90 = vmatmul.mubr.bf16.gmra.mxu0 %v55
  %v91 = vpop.f32.mrf.mxu0
  %v92 = vadd.f32 %v39, %v91
  %v93 = vpop.f32.mrf.mxu0
  %v94 = vpop.f32.mrf.mxu0
  %v95 = vpop.f32.mrf.mxu0
  %96 = vdwg.mxu0
  %v97 = vmax.f32 %v92, 0.0
  %v98 = vpack.c.bf16 %v97, %v97
  %v99 = vld [vmem:[%s3] sm:$0xf]
  %v100 = vld [vmem:[%s3 + $0x4] sm:$0xf]
  %v101 = vld [vmem:[%s3 + $0x8] sm:$0xf]
  %v102 = vld [vmem:[%s3 + $0xc] sm:$0xf]
  %v103 = vld [vmem:[%s3 + $0x10] sm:$0xf]
  %v104 = vld [vmem:[%s3 + $0x14] sm:$0xf]
  %v105 = vld [vmem:[%s3 + $0x18] sm:$0xf]
  %v106 = vld [vmem:[%s3 + $0x1c] sm:$0xf]
  %v107 = vld [vmem:[%s3 + $0x20] sm:$0xf]
  %v108 = vld [vmem:[%s3 + $0x24] sm:$0xf]
  %v109 = vld [vmem:[%s3 + $0x28] sm:$0xf]
  %v110 = vld [vmem:[%s3 + $0x2c] sm:$0xf]
  %v111 = vld [vmem:[%s3 + $0x30] sm:$0xf]
  %v112 = vld [vmem:[%s3 + $0x34] sm:$0xf]
  %v113 = vld [vmem:[%s3 + $0x38] sm:$0xf]
  %v114 = vld [vmem:[%s3 + $0x3c] sm:$0xf]
  %v115 = vld [vmem:[%s4] sm:$0x1]
  %v117 = vlaneseq
  %v118 = vshrl.u32 %v117, 7
  %v119 = vsub.s32 0, %v118
  %v120 = vrot.slane %v115, %v119
  %v138 = vunpack.c.l.b16 %v99
  %v139 = vunpack.c.l.b16 %v100
  %v140 = vunpack.c.l.b16 %v101
  %v141 = vunpack.c.l.b16 %v102
  %v142 = vunpack.c.l.b16 %v103
  %v143 = vunpack.c.l.b16 %v104
  %v144 = vunpack.c.l.b16 %v105
  %v145 = vunpack.c.l.b16 %v106
  %v146 = vunpack.c.l.b16 %v107
  %v147 = vunpack.c.l.b16 %v108
  %v148 = vunpack.c.l.b16 %v109
  %v149 = vunpack.c.l.b16 %v110
  %v150 = vunpack.c.l.b16 %v111
  %v151 = vunpack.c.l.b16 %v112
  %v152 = vunpack.c.l.b16 %v113
  %v153 = vunpack.c.l.b16 %v114
  %v154 = vpack.c.b16 %v139, %v138
  %v155 = vpack.c.b16 %v141, %v140
  %v156 = vpack.c.b16 %v143, %v142
  %v157 = vpack.c.b16 %v145, %v144
  %v158 = vpack.c.b16 %v147, %v146
  %v159 = vpack.c.b16 %v149, %v148
  %v160 = vpack.c.b16 %v151, %v150
  %v161 = vpack.c.b16 %v153, %v152
  %170 = vmatprep.subr.bf16.mxu0 0
  %171 = vmatpush1.bf16.msra.mxu0 %v161
  %172 = vmatprep.subr.bf16.mxu0 0
  %173 = vmatpush1.bf16.msra.mxu0 %v160
  %174 = vmatprep.subr.bf16.mxu0 0
  %175 = vmatpush1.bf16.msra.mxu0 %v159
  %176 = vmatprep.subr.bf16.mxu0 0
  %177 = vmatpush1.bf16.msra.mxu0 %v158
  %178 = vmatprep.subr.bf16.mxu0 0
  %179 = vmatpush1.bf16.msra.mxu0 %v157
  %180 = vmatprep.subr.bf16.mxu0 0
  %181 = vmatpush1.bf16.msra.mxu0 %v156
  %182 = vmatprep.subr.bf16.mxu0 0
  %183 = vmatpush1.bf16.msra.mxu0 %v155
  %184 = vmatprep.subr.bf16.mxu0 0
  %185 = vmatpush1.bf16.msra.mxu0 %v154
  %186 = vmatprep.subr.bf16.mxu0 0
  %187 = vmatpush2.bf16.msra.mxu0 0
  %188 = vmatprep.subr.bf16.mxu0 0
  %189 = vmatpush2.bf16.msra.mxu0 0
  %190 = vmatprep.subr.bf16.mxu0 0
  %191 = vmatpush2.bf16.msra.mxu0 0
  %192 = vmatprep.subr.bf16.mxu0 0
  %193 = vmatpush2.bf16.msra.mxu0 0
  %194 = vmatprep.subr.bf16.mxu0 0
  %195 = vmatpush2.bf16.msra.mxu0 0
  %196 = vmatprep.subr.bf16.mxu0 0
  %197 = vmatpush2.bf16.msra.mxu0 0
  %198 = vmatprep.subr.bf16.mxu0 0
  %199 = vmatpush2.bf16.msra.mxu0 0
  %200 = vmatprep.subr.bf16.mxu0 0
  %201 = vmatpush2.bf16.msra.mxu0 0
  %202 = vmatprep.mubr.bf16.mxu0 0
  %203 = vmatmul.mubr.bf16.gmra.mxu0 %v98
  %v204 = vpop.f32.mrf.mxu0
  %v205 = vadd.f32 %v120, %v204
  %v206 = vpop.f32.mrf.mxu0
  %v207 = vpop.f32.mrf.mxu0
  %v208 = vpop.f32.mrf.mxu0
  %209 = vdwg.mxu0
  %v210 = vmax.f32 %v205, 0.0
  %v211 = vld [vmem:[%s5] sm:$0x1]
  %v213 = vlaneseq
  %v214 = vshrl.u32 %v213, 7
  %v215 = vsub.s32 0, %v214
  %v216 = vrot.slane %v211, %v215
  %v218 = vmul.f32 %v210, %v216
  %vm219 = vcmask 523264
  %v220 = vsel %vm219, %v218, 0.0
  %221 = vadd.xlane.f32.xlu0 %v220
  %v222 = vpop.xlane.xlu0 %221
  %s223 = sld [smem:[#allocation2]]
  %v224 = vstv %s223
  %v225 = vadd.f32 %v222, %v224
  %vm226 = vcmask 7168
  %227 = vst.msk [vmem:[%s7] sm:$0xff] %vm226, %v225
  // Predicated region
  $region30: #{tpu_custom_call.1} parent=0 // pred_check
    _
  $region31: #{tpu_custom_call.1} parent=0 // pred_check_branch
    %229 = sbr.rel (0) target = $region33
  $region32: #{tpu_custom_call.1} parent=0 // pred_region
    _
  $region33: #{tpu_custom_call.1} parent=0 // pred_fallthru
    _
  // Predicated region
  $region34: #{tpu_custom_call.1} parent=0 // pred_check
    _
  $region35: #{tpu_custom_call.1} parent=0 // pred_check_branch
    %231 = sbr.rel (0) target = $region37
  $region36: #{tpu_custom_call.1} parent=0 // pred_region
    _
  $region37: #{tpu_custom_call.1} parent=0 // pred_fallthru
    _

</llo_original>
